<compile_context>
chip_gen: v7x
topology: tpu7x:2x2x1
jax: 0.10.0
libtpu: 0.0.40
codegen_flags: <defaults>
</compile_context>

<pallas_src>
import functools

import jax
import jax.numpy as jnp
from jax import lax
from jax.experimental import pallas as pl
from jax.experimental.pallas import tpu as pltpu


def _round_up(v, m):
    return ((v + m - 1) // m) * m


def _prosodic_kernel(x_ref, lo_ref, hi_ref, tab_ref, o_ref, oh_ref, *,
                     block_b, n_bins, tt):
    # x_ref:  (2*BB, TT)      rows alternate [pitch_b, energy_b] per batch row b
    # lo_ref: (2*n_bins, 1)   lower interval bounds [pitch rows | energy rows]
    # hi_ref: (2*n_bins, 1)   upper interval bounds
    # tab_ref:(H, 2*n_bins)   fused, pre-transposed embedding tables
    # o_ref:  (BB, H, TT)     output block, already in [B, H, T] layout
    # oh_ref: (2*n_bins, BB*TT) VMEM scratch for the batched one-hot
    lo = lo_ref[...]                          # (2n, 1)
    hi = hi_ref[...]                          # (2n, 1)
    n2 = 2 * n_bins

    # Sublane selector: first n_bins rows look at pitch, last n_bins at energy.
    row = lax.broadcasted_iota(jnp.int32, (n2, tt), 0)
    is_pitch = row < n_bins                   # (2n, TT)

    x = x_ref[...]                            # (2*BB, TT), T stays on lanes
    for b in range(block_b):                  # static unroll; slices lane-aligned
        p = x[2 * b:2 * b + 1, :]             # (1, TT) pitch of batch row b
        e = x[2 * b + 1:2 * b + 2, :]         # (1, TT) energy of batch row b
        vals = jnp.where(is_pitch, p, e)      # (2n, TT)
        # bucketize(v, bins, right=False): idx i  <=>  bins[i-1] < v <= bins[i]
        oh_ref[:, b * tt:(b + 1) * tt] = (
            (vals > lo) & (vals <= hi)).astype(jnp.float32)

    # One fused pitch+energy gather matmul for the whole block on the MXU:
    # (H, 2n) @ (2n, BB*TT) -> (H, BB*TT), exact (0/1 x f32).
    reps = jnp.dot(tab_ref[...], oh_ref[...],
                   preferred_element_type=jnp.float32)
    for b in range(block_b):                  # lane-aligned column slices
        o_ref[b] = reps[:, b * tt:(b + 1) * tt].astype(o_ref.dtype)


def discrete_prosodic_net(x, pitch_bins, energy_bins, pitch_emb, energy_emb,
                          *, block_b=None, block_t=None,
                          out_dtype=jnp.float32,
                          vmem_block_budget_bytes=24 * 1024 * 1024):
    """x: [B, 2, T] float -> [B, H, T] (matches the PyTorch module)."""
    B, C, T = x.shape
    assert C == 2, "expected pitch+energy channels"
    n_bins, H = pitch_emb.shape
    assert pitch_bins.shape == (n_bins - 1,)
    assert energy_bins.shape == (n_bins - 1,)

    f32 = jnp.float32
    neg = jnp.full((1,), -jnp.inf, f32)
    pos = jnp.full((1,), jnp.inf, f32)
    # Interval bounds with sentinels, stacked [pitch | energy] along sublanes.
    lo = jnp.concatenate([neg, pitch_bins.astype(f32),
                          neg, energy_bins.astype(f32)]).reshape(2 * n_bins, 1)
    hi = jnp.concatenate([pitch_bins.astype(f32), pos,
                          energy_bins.astype(f32), pos]).reshape(2 * n_bins, 1)
    # Fused, pre-transposed table: (H, 2*n_bins) = [pitch_emb.T | energy_emb.T]
    tab = jnp.concatenate([pitch_emb.astype(f32).T,
                           energy_emb.astype(f32).T], axis=1)

    # Free reshape (no data movement): rows alternate pitch_b, energy_b.
    x2 = x.astype(f32).reshape(B * 2, T)

    # Block sizes: BB multiple of 8 (or the full batch); TT multiple of 128,
    # shrunk until the double-buffered footprint fits the per-step VMEM budget.
    BB = block_b if block_b is not None else (8 if B >= 8 else B)
    if block_t is not None:
        TT = block_t
    else:
        TT = min(512, _round_up(T, 128))

        def footprint(tt):
            # 2x(input+output) blocks + one-hot scratch + matmul result temp.
            return 4 * BB * tt * (3 * H + 2 * n_bins + 4)

        while TT > 128 and footprint(TT) > vmem_block_budget_bytes:
            TT //= 2
    assert TT % 128 == 0

    grid = (pl.cdiv(B, BB), pl.cdiv(T, TT))
    kernel = functools.partial(_prosodic_kernel,
                               block_b=BB, n_bins=n_bins, tt=TT)

    return pl.pallas_call(
        kernel,
        out_shape=jax.ShapeDtypeStruct((B, H, T), out_dtype),
        grid=grid,
        in_specs=[
            pl.BlockSpec((2 * BB, TT), lambda i, j: (i, j)),
            pl.BlockSpec((2 * n_bins, 1), lambda i, j: (0, 0)),
            pl.BlockSpec((2 * n_bins, 1), lambda i, j: (0, 0)),
            pl.BlockSpec((H, 2 * n_bins), lambda i, j: (0, 0)),
        ],
        out_specs=pl.BlockSpec((BB, H, TT), lambda i, j: (i, 0, j)),
        scratch_shapes=[pltpu.VMEM((2 * n_bins, BB * TT), jnp.float32)],
        compiler_params=pltpu.CompilerParams(
            dimension_semantics=("parallel", "parallel"),
            vmem_limit_bytes=32 * 1024 * 1024),
    )(x2, lo, hi, tab)


def _reference(x, pitch_bins, energy_bins, pitch_emb, energy_emb):
    pitch = x[:, 0, :]
    energy = x[:, 1, :]
    p_idx = jnp.searchsorted(pitch_bins, pitch, side="left")
    e_idx = jnp.searchsorted(energy_bins, energy, side="left")
    reps = pitch_emb[p_idx] + energy_emb[e_idx]      # [B, T, H]
    return jnp.transpose(reps, (0, 2, 1))            # [B, H, T]


def _run_case(key, B, T, n_bins, hidden_dim):
    k_x, k_p, k_e = jax.random.split(key, 3)
    pitch_bins = jnp.linspace(-2.0, 2.0, n_bins - 1, dtype=jnp.float32)
    energy_bins = jnp.linspace(-1.5, 1.5, n_bins - 1, dtype=jnp.float32)
    pitch_emb = jax.random.normal(k_p, (n_bins, hidden_dim), dtype=jnp.float32)
    energy_emb = jax.random.normal(k_e, (n_bins, hidden_dim), dtype=jnp.float32)
    x = jax.random.normal(k_x, (B, 2, T), dtype=jnp.float32) * 2.0

    out = discrete_prosodic_net(x, pitch_bins, energy_bins, pitch_emb, energy_emb)
    out = jax.block_until_ready(out)

    ref = _reference(x, pitch_bins, energy_bins, pitch_emb, energy_emb)
    assert out.shape == (B, hidden_dim, T), out.shape
    assert jnp.allclose(out, ref, atol=1e-5), "mismatch vs reference"


if __name__ == "__main__":
    # Synthetic deterministic config (in place of the prosodic_stats .npy file).
    # TODO(synk): production loads pitch/energy min/max from prosodic_stats_path.
    key = jax.random.PRNGKey(0)
    k1, k2 = jax.random.split(key)

    # Small case from the module spec: batch=2, channels=2, seq=8, hidden=32.
    _run_case(k1, B=2, T=8, n_bins=8, hidden_dim=32)
    # Slightly larger case exercising B-tail and T-tail block masking.
    _run_case(k2, B=10, T=200, n_bins=8, hidden_dim=64)

    print("KERNEL_OK")
</pallas_src>

<mosaic_0001>
module attributes {stable_mosaic.version = 11 : i64} {
  func.func @_prosodic_kernel(%arg0: i32, %arg1: i32, %arg2: memref<4x128xf32, #tpu.memory_space<vmem>>, %arg3: memref<16x1xf32, #tpu.memory_space<vmem>>, %arg4: memref<16x1xf32, #tpu.memory_space<vmem>>, %arg5: memref<32x16xf32, #tpu.memory_space<vmem>>, %arg6: memref<2x32x128xf32, #tpu.memory_space<vmem>>, %arg7: memref<16x256xf32, #tpu.memory_space<vmem>>) attributes {dimension_semantics = [#tpu.dimension_semantics<parallel>, #tpu.dimension_semantics<parallel>], iteration_bounds = array<i64: 1, 1>, scalar_prefetch = 0 : i64, scratch_operands = 1 : i64, tpu.core_type = #tpu.core_type<tc>, window_params = [{transform_indices = @transform_0, window_bounds = array<i64: 4, 128>}, {pipeline_mode = #tpu.pipeline_mode<synchronous>, transform_indices = @transform_1, window_bounds = array<i64: 16, 1>}, {pipeline_mode = #tpu.pipeline_mode<synchronous>, transform_indices = @transform_2, window_bounds = array<i64: 16, 1>}, {pipeline_mode = #tpu.pipeline_mode<synchronous>, transform_indices = @transform_3, window_bounds = array<i64: 32, 16>}, {transform_indices = @transform_4, window_bounds = array<i64: 2, 32, 128>}]} {
    %c0 = arith.constant 0 : index
    %c0_0 = arith.constant 0 : index
    %0 = vector.load %arg3[%c0, %c0_0] : memref<16x1xf32, #tpu.memory_space<vmem>>, vector<16x1xf32>
    %c0_1 = arith.constant 0 : index
    %c0_2 = arith.constant 0 : index
    %1 = vector.load %arg4[%c0_1, %c0_2] : memref<16x1xf32, #tpu.memory_space<vmem>>, vector<16x1xf32>
    %2 = tpu.iota {dimensions = array<i32: 0>} : vector<16x128xi32>
    %c8_i32 = arith.constant 8 : i32
    %3 = vector.broadcast %c8_i32 : i32 to vector<16x128xi32>
    %4 = arith.cmpi slt, %2, %3 : vector<16x128xi32>
    %c0_3 = arith.constant 0 : index
    %c0_4 = arith.constant 0 : index
    %5 = vector.load %arg2[%c0_3, %c0_4] : memref<4x128xf32, #tpu.memory_space<vmem>>, vector<4x128xf32>
    %6 = vector.extract_strided_slice %5 {offsets = [0, 0], sizes = [1, 128], strides = [1, 1]} : vector<4x128xf32> to vector<1x128xf32>
    %7 = vector.extract_strided_slice %5 {offsets = [1, 0], sizes = [1, 128], strides = [1, 1]} : vector<4x128xf32> to vector<1x128xf32>
    %8 = vector.shape_cast %6 : vector<1x128xf32> to vector<1x128xf32>
    %9 = vector.broadcast %8 : vector<1x128xf32> to vector<16x128xf32>
    %10 = vector.shape_cast %7 : vector<1x128xf32> to vector<1x128xf32>
    %11 = vector.broadcast %10 : vector<1x128xf32> to vector<16x128xf32>
    %12 = arith.select %4, %9, %11 : vector<16x128xi1>, vector<16x128xf32>
    %13 = vector.broadcast %0 : vector<16x1xf32> to vector<16x128xf32>
    %14 = arith.cmpf ogt, %12, %13 : vector<16x128xf32>
    %15 = vector.broadcast %1 : vector<16x1xf32> to vector<16x128xf32>
    %16 = arith.cmpf ole, %12, %15 : vector<16x128xf32>
    %17 = arith.andi %14, %16 : vector<16x128xi1>
    %18 = arith.extui %17 : vector<16x128xi1> to vector<16x128xi32>
    %19 = arith.sitofp %18 : vector<16x128xi32> to vector<16x128xf32>
    %c0_5 = arith.constant 0 : index
    %c0_6 = arith.constant 0 : index
    %20 = vector.load %arg7[%c0_5, %c0_6] : memref<16x256xf32, #tpu.memory_space<vmem>>, vector<16x128xf32>
    tpu.vector_store %arg7[%c0_5, %c0_6], %19 {strides = array<i32>} : memref<16x256xf32, #tpu.memory_space<vmem>>, vector<16x128xf32>,
    %21 = vector.extract_strided_slice %5 {offsets = [2, 0], sizes = [1, 128], strides = [1, 1]} : vector<4x128xf32> to vector<1x128xf32>
    %22 = vector.extract_strided_slice %5 {offsets = [3, 0], sizes = [1, 128], strides = [1, 1]} : vector<4x128xf32> to vector<1x128xf32>
    %23 = vector.shape_cast %21 : vector<1x128xf32> to vector<1x128xf32>
    %24 = vector.broadcast %23 : vector<1x128xf32> to vector<16x128xf32>
    %25 = vector.shape_cast %22 : vector<1x128xf32> to vector<1x128xf32>
    %26 = vector.broadcast %25 : vector<1x128xf32> to vector<16x128xf32>
    %27 = arith.select %4, %24, %26 : vector<16x128xi1>, vector<16x128xf32>
    %28 = vector.broadcast %0 : vector<16x1xf32> to vector<16x128xf32>
    %29 = arith.cmpf ogt, %27, %28 : vector<16x128xf32>
    %30 = vector.broadcast %1 : vector<16x1xf32> to vector<16x128xf32>
    %31 = arith.cmpf ole, %27, %30 : vector<16x128xf32>
    %32 = arith.andi %29, %31 : vector<16x128xi1>
    %33 = arith.extui %32 : vector<16x128xi1> to vector<16x128xi32>
    %34 = arith.sitofp %33 : vector<16x128xi32> to vector<16x128xf32>
    %c0_7 = arith.constant 0 : index
    %c128 = arith.constant 128 : index
    %35 = vector.load %arg7[%c0_7, %c128] : memref<16x256xf32, #tpu.memory_space<vmem>>, vector<16x128xf32>
    tpu.vector_store %arg7[%c0_7, %c128], %34 {strides = array<i32>} : memref<16x256xf32, #tpu.memory_space<vmem>>, vector<16x128xf32>,
    %c0_8 = arith.constant 0 : index
    %c0_9 = arith.constant 0 : index
    %36 = vector.load %arg5[%c0_8, %c0_9] : memref<32x16xf32, #tpu.memory_space<vmem>>, vector<32x16xf32>
    %c0_10 = arith.constant 0 : index
    %c0_11 = arith.constant 0 : index
    %37 = vector.load %arg7[%c0_10, %c0_11] : memref<16x256xf32, #tpu.memory_space<vmem>>, vector<16x256xf32>
    %cst = arith.constant dense<0.000000e+00> : vector<32x256xf32>
    %38 = tpu.matmul %36, %37, %cst {dimension_numbers = #tpu.dot_dimension_numbers<[1], [0], [0], [1], [0, 0, 1, 1], [], []>} : vector<32x16xf32>, vector<16x256xf32>, vector<32x256xf32> -> vector<32x256xf32>
    %39 = vector.extract_strided_slice %38 {offsets = [0, 0], sizes = [32, 128], strides = [1, 1]} : vector<32x256xf32> to vector<32x128xf32>
    %c0_12 = arith.constant 0 : index
    %c0_13 = arith.constant 0 : index
    %c0_14 = arith.constant 0 : index
    %40 = vector.load %arg6[%c0_12, %c0_13, %c0_14] : memref<2x32x128xf32, #tpu.memory_space<vmem>>, vector<1x32x128xf32>
    %41 = vector.shape_cast %40 : vector<1x32x128xf32> to vector<32x128xf32>
    %42 = vector.shape_cast %39 : vector<32x128xf32> to vector<1x32x128xf32>
    tpu.vector_store %arg6[%c0_12, %c0_13, %c0_14], %42 {strides = array<i32>} : memref<2x32x128xf32, #tpu.memory_space<vmem>>, vector<1x32x128xf32>,
    %43 = vector.extract_strided_slice %38 {offsets = [0, 128], sizes = [32, 128], strides = [1, 1]} : vector<32x256xf32> to vector<32x128xf32>
    %c1 = arith.constant 1 : index
    %c0_15 = arith.constant 0 : index
    %c0_16 = arith.constant 0 : index
    %44 = vector.load %arg6[%c1, %c0_15, %c0_16] : memref<2x32x128xf32, #tpu.memory_space<vmem>>, vector<1x32x128xf32>
    %45 = vector.shape_cast %44 : vector<1x32x128xf32> to vector<32x128xf32>
    %46 = vector.shape_cast %43 : vector<32x128xf32> to vector<1x32x128xf32>
    tpu.vector_store %arg6[%c1, %c0_15, %c0_16], %46 {strides = array<i32>} : memref<2x32x128xf32, #tpu.memory_space<vmem>>, vector<1x32x128xf32>,
    return
  }
  func.func @transform_0(%arg0: i32, %arg1: i32) -> (i32, i32) {
    %c0_i32 = arith.constant 0 : i32
    return %arg0, %arg1 : i32, i32
  }
  func.func @transform_1(%arg0: i32, %arg1: i32) -> (i32, i32) {
    %c0_i32 = arith.constant 0 : i32
    %c0_i32_0 = arith.constant 0 : i32
    %c0_i32_1 = arith.constant 0 : i32
    return %c0_i32, %c0_i32_0 : i32, i32
  }
  func.func @transform_2(%arg0: i32, %arg1: i32) -> (i32, i32) {
    %c0_i32 = arith.constant 0 : i32
    %c0_i32_0 = arith.constant 0 : i32
    %c0_i32_1 = arith.constant 0 : i32
    return %c0_i32, %c0_i32_0 : i32, i32
  }
  func.func @transform_3(%arg0: i32, %arg1: i32) -> (i32, i32) {
    %c0_i32 = arith.constant 0 : i32
    %c0_i32_0 = arith.constant 0 : i32
    %c0_i32_1 = arith.constant 0 : i32
    return %c0_i32, %c0_i32_0 : i32, i32
  }
  func.func @transform_4(%arg0: i32, %arg1: i32) -> (i32, i32, i32) {
    %c0_i32 = arith.constant 0 : i32
    %c0_i32_0 = arith.constant 0 : i32
    return %arg0, %c0_i32, %arg1 : i32, i32, i32
  }
}

</mosaic_0001>

<llo_original>
// kernel: tpu_custom_call.1
$region0: #{tpu_custom_call.1}
  #allocation0 [shape = 'u32[]', space=smem, size = 0x4, offset = 0x4, fixed_abs, tag = 'smem constant byte address 0x4 - core index']
  #allocation1 [shape = 'u32[144,128]{1,0:T(1,128)}', space=vmem, size = 0x12000, scoped, tag = 'internal scratch']
  #allocation2 [shape = 'f32[16,256]{1,0:T(8,128)}', space=vmem, size = 0x4000, scoped, tag = 'scratch operand']
  %s0 = inlined_call_operand.vmem [shape: f32[4,8], index: 0, kind: input, shape index: {}]
  %s1 = inlined_call_operand.vmem [shape: f32[16,1], index: 1, kind: input, shape index: {}]
  %s2 = inlined_call_operand.vmem [shape: f32[16,1], index: 2, kind: input, shape index: {}]
  %s3 = inlined_call_operand.vmem [shape: f32[32,16], index: 3, kind: input, shape index: {}]
  %s4 = inlined_call_operand.vmem [shape: f32[2,32,8], index: 4, kind: output, shape index: {}]
  %s5 = sld [smem:[#allocation0]]
  $region26: #{tpu_custom_call.1} parent=0
    _
  %s7 = ssub.s32 1, %s5
  %s8 = scalar_select 0, %s7, %s5
  // Predicated region
  $region2: #{tpu_custom_call.1} parent=0 // pred_check
    _
  $region3: #{tpu_custom_call.1} parent=0 // pred_check_branch
    %10 = sbr.rel (0) target = $region5
  $region4: #{tpu_custom_call.1} parent=0 // pred_region
    _
  $region5: #{tpu_custom_call.1} parent=0 // pred_fallthru
    _
  // Predicated region
  $region6: #{tpu_custom_call.1} parent=0 // pred_check
    _
  $region7: #{tpu_custom_call.1} parent=0 // pred_check_branch
    %12 = sbr.rel (0) target = $region9
  $region8: #{tpu_custom_call.1} parent=0 // pred_region
    _
  $region9: #{tpu_custom_call.1} parent=0 // pred_fallthru
    _
  // Predicated region
  $region10: #{tpu_custom_call.1} parent=0 // pred_check
    _
  $region11: #{tpu_custom_call.1} parent=0 // pred_check_branch
    %14 = sbr.rel (0) target = $region13
  $region12: #{tpu_custom_call.1} parent=0 // pred_region
    _
  $region13: #{tpu_custom_call.1} parent=0 // pred_fallthru
    _
  // Predicated region
  $region14: #{tpu_custom_call.1} parent=0 // pred_check
    _
  $region15: #{tpu_custom_call.1} parent=0 // pred_check_branch
    %16 = sbr.rel (0) target = $region17
  $region16: #{tpu_custom_call.1} parent=0 // pred_region
    _
  $region17: #{tpu_custom_call.1} parent=0 // pred_fallthru
    _
  %v17 = vld [vmem:[%s1] sm:$0xff]
  %v18 = vld [vmem:[%s1 + $0x8] sm:$0xff]
  %v19 = vld [vmem:[%s2] sm:$0xff]
  %v20 = vld [vmem:[%s2 + $0x8] sm:$0xff]
  %v21 = vlaneseq
  %v22 = vshrl.u32 %v21, 7
  %v23 = vadd.s32 %v22, 8
  %vm24 = vcmp.lt.s32.totalorder %v22, 8
  %vm25 = vcmp.lt.s32.totalorder %v23, 8
  %v26 = vld [vmem:[%s0] sm:$0xf]
  %v27 = vlaneseq
  %v28 = vshrl.u32 %v27, 7
  %v29 = vsub.s32 0, %v28
  %v30 = vrot.slane %v26, %v29
  %v31 = vlaneseq
  %v32 = vshrl.u32 %v31, 7
  %v33 = vsub.s32 1, %v32
  %v34 = vrot.slane %v26, %v33
  %v35 = vsel %vm24, %v30, %v34
  %v36 = vsel %vm25, %v30, %v34
  %38 = vset.pattern.permute.xlu0 0
  %39 = vperm.xlu0 %38, %v17
  %v40 = vpop.permute.xlu0 %39
  %43 = vset.pattern.permute.xlu0 0
  %44 = vperm.xlu0 %43, %v18
  %v45 = vpop.permute.xlu0 %44
  %vm47 = vcmp.gt.f32.partialorder %v35, %v40
  %vm48 = vcmp.gt.f32.partialorder %v36, %v45
  %50 = vset.pattern.permute.xlu0 0
  %51 = vperm.xlu0 %50, %v19
  %v52 = vpop.permute.xlu0 %51
  %55 = vset.pattern.permute.xlu0 0
  %56 = vperm.xlu0 %55, %v20
  %v57 = vpop.permute.xlu0 %56
  %vm59 = vcmp.le.f32.partialorder %v35, %v52
  %vm60 = vcmp.le.f32.partialorder %v36, %v57
  %vm61 = vmand %vm47, %vm59
  %vm62 = vmand %vm48, %vm60
  %v63 = vsel %vm61, 1, 0
  %v64 = vsel %vm62, 1, 0
  %v65 = vcvt.s32.f32 %v63
  %v66 = vcvt.s32.f32 %v64
  %67 = vst [vmem:[#allocation2] sm:$0xff] %v65
  %68 = vst [vmem:[#allocation2 + $0x10] sm:$0xff] %v66
  %v69 = vlaneseq
  %v70 = vshrl.u32 %v69, 7
  %v71 = vsub.s32 2, %v70
  %v72 = vrot.slane %v26, %v71
  %v73 = vlaneseq
  %v74 = vshrl.u32 %v73, 7
  %v75 = vsub.s32 3, %v74
  %v76 = vrot.slane %v26, %v75
  %v77 = vsel %vm24, %v72, %v76
  %v78 = vsel %vm25, %v72, %v76
  %vm79 = vcmp.gt.f32.partialorder %v77, %v40
  %vm80 = vcmp.gt.f32.partialorder %v78, %v45
  %vm81 = vcmp.le.f32.partialorder %v77, %v52
  %vm82 = vcmp.le.f32.partialorder %v78, %v57
  %vm83 = vmand %vm79, %vm81
  %vm84 = vmand %vm80, %vm82
  %v85 = vsel %vm83, 1, 0
  %v86 = vsel %vm84, 1, 0
  %v87 = vcvt.s32.f32 %v85
  %v88 = vcvt.s32.f32 %v86
  %89 = vst [vmem:[#allocation2 + $0x8] sm:$0xff] %v87
  %90 = vst [vmem:[#allocation2 + $0x18] sm:$0xff] %v88
  %v91 = vld [vmem:[%s3] sm:$0xff]
  %v92 = vld [vmem:[%s3 + $0x8] sm:$0xff]
  %v93 = vld [vmem:[%s3 + $0x10] sm:$0xff]
  %v94 = vld [vmem:[%s3 + $0x18] sm:$0xff]
  %v95 = vld [vmem:[#allocation2] sm:$0xff]
  %v96 = vld [vmem:[#allocation2 + $0x8] sm:$0xff]
  %v97 = vld [vmem:[#allocation2 + $0x10] sm:$0xff]
  %v98 = vld [vmem:[#allocation2 + $0x18] sm:$0xff]
  %vm99 = vcmask 130048
  %v101 = vsel %vm99, %v91, 0
  %v104 = vsel %vm99, %v92, 0
  %v107 = vsel %vm99, %v93, 0
  %v110 = vsel %vm99, %v94, 0
  %112 = vmatprep.subr.mxu0 %v96
  %113 = vmatpush1.msra.mxu0 %v95
  %114 = vmatprep.subr.mxu0 %v98
  %115 = vmatpush1.msra.mxu0 %v97
  %116 = vmatprep.subr.mxu0 0.0
  %117 = vmatpush1.msra.mxu0 0.0
  %118 = vmatprep.subr.mxu0 0.0
  %119 = vmatpush1.msra.mxu0 0.0
  %120 = vmatprep.subr.mxu0 0.0
  %121 = vmatpush1.msra.mxu0 0.0
  %122 = vmatprep.subr.mxu0 0.0
  %123 = vmatpush1.msra.mxu0 0.0
  %124 = vmatprep.subr.mxu0 0.0
  %125 = vmatpush1.msra.mxu0 0.0
  %126 = vmatprep.subr.mxu0 0.0
  %127 = vmatpush1.msra.mxu0 0.0
  %128 = vmatprep.subr.mxu0 0.0
  %129 = vmatpush1.msra.mxu0 0.0
  %130 = vmatprep.subr.mxu0 0.0
  %131 = vmatpush1.msra.mxu0 0.0
  %132 = vmatprep.subr.mxu0 0.0
  %133 = vmatpush1.msra.mxu0 0.0
  %134 = vmatprep.subr.mxu0 0.0
  %135 = vmatpush1.msra.mxu0 0.0
  %136 = vmatprep.subr.mxu0 0.0
  %137 = vmatpush1.msra.mxu0 0.0
  %138 = vmatprep.subr.mxu0 0.0
  %139 = vmatpush1.msra.mxu0 0.0
  %140 = vmatprep.subr.mxu0 0.0
  %141 = vmatpush1.msra.mxu0 0.0
  %142 = vmatprep.subr.mxu0 0.0
  %143 = vmatpush1.msra.mxu0 0.0
  %144 = vmatprep.subr.mxu0 0.0
  %145 = vmatpush1.msra.mxu0 0.0
  %146 = vmatprep.subr.mxu0 0.0
  %147 = vmatpush1.msra.mxu0 0.0
  %148 = vmatprep.subr.mxu0 0.0
  %149 = vmatpush1.msra.mxu0 0.0
  %150 = vmatprep.subr.mxu0 0.0
  %151 = vmatpush1.msra.mxu0 0.0
  %152 = vmatprep.subr.mxu0 0.0
  %153 = vmatpush1.msra.mxu0 0.0
  %154 = vmatprep.subr.mxu0 0.0
  %155 = vmatpush1.msra.mxu0 0.0
  %156 = vmatprep.subr.mxu0 0.0
  %157 = vmatpush1.msra.mxu0 0.0
  %158 = vmatprep.subr.mxu0 0.0
  %159 = vmatpush1.msra.mxu0 0.0
  %160 = vmatprep.subr.mxu0 0.0
  %161 = vmatpush1.msra.mxu0 0.0
  %162 = vmatprep.subr.mxu0 0.0
  %163 = vmatpush1.msra.mxu0 0.0
  %164 = vmatprep.subr.mxu0 0.0
  %165 = vmatpush1.msra.mxu0 0.0
  %166 = vmatprep.subr.mxu0 0.0
  %167 = vmatpush1.msra.mxu0 0.0
  %168 = vmatprep.subr.mxu0 0.0
  %169 = vmatpush1.msra.mxu0 0.0
  %170 = vmatprep.subr.mxu0 0.0
  %171 = vmatpush1.msra.mxu0 0.0
  %172 = vmatprep.subr.mxu0 0.0
  %173 = vmatpush1.msra.mxu0 0.0
  %174 = vmatprep.subr.mxu0 0.0
  %175 = vmatpush1.msra.mxu0 0.0
  %176 = vmatprep.mubr.f32.mxu0 0.0
  %177 = vmatmul.mubr.f32.gmra.mrb[0].mxu0 %v101
  %v178 = vpop.f32.mrb[0].mxu0
  %v179 = vadd.f32 0.0, %v178
  %v180 = vpop.f32.mrb[0].mxu0
  %v181 = vadd.f32 0.0, %v180
  %182 = vmatprep.mubr.f32.mxu0 0.0
  %183 = vmatmul.mubr.f32.gmra.mrb[0].mxu0 %v104
  %v184 = vpop.f32.mrb[0].mxu0
  %v185 = vadd.f32 0.0, %v184
  %v186 = vpop.f32.mrb[0].mxu0
  %v187 = vadd.f32 0.0, %v186
  %188 = vmatprep.mubr.f32.mxu0 0.0
  %189 = vmatmul.mubr.f32.gmra.mrb[0].mxu0 %v107
  %v190 = vpop.f32.mrb[0].mxu0
  %v191 = vadd.f32 0.0, %v190
  %v192 = vpop.f32.mrb[0].mxu0
  %v193 = vadd.f32 0.0, %v192
  %194 = vmatprep.mubr.f32.mxu0 0.0
  %195 = vmatmul.mubr.f32.gmra.mrb[0].mxu0 %v110
  %v196 = vpop.f32.mrb[0].mxu0
  %v197 = vadd.f32 0.0, %v196
  %v198 = vpop.f32.mrb[0].mxu0
  %v199 = vadd.f32 0.0, %v198
  %200 = vdwg.mxu0
  %201 = vst [vmem:[%s4] sm:$0xff] %v179
  %202 = vst [vmem:[%s4 + $0x8] sm:$0xff] %v185
  %203 = vst [vmem:[%s4 + $0x10] sm:$0xff] %v191
  %204 = vst [vmem:[%s4 + $0x18] sm:$0xff] %v197
  %s205 = scalar_lea.vmem %s4, 32
  %206 = vst [vmem:[%s205] sm:$0xff] %v181
  %207 = vst [vmem:[%s205 + $0x8] sm:$0xff] %v187
  %208 = vst [vmem:[%s205 + $0x10] sm:$0xff] %v193
  %209 = vst [vmem:[%s205 + $0x18] sm:$0xff] %v199
  // Predicated region
  $region18: #{tpu_custom_call.1} parent=0 // pred_check
    _
  $region19: #{tpu_custom_call.1} parent=0 // pred_check_branch
    %211 = sbr.rel (0) target = $region21
  $region20: #{tpu_custom_call.1} parent=0 // pred_region
    _
  $region21: #{tpu_custom_call.1} parent=0 // pred_fallthru
    _
  // Predicated region
  $region22: #{tpu_custom_call.1} parent=0 // pred_check
    _
  $region23: #{tpu_custom_call.1} parent=0 // pred_check_branch
    %213 = sbr.rel (0) target = $region25
  $region24: #{tpu_custom_call.1} parent=0 // pred_region
    _
  $region25: #{tpu_custom_call.1} parent=0 // pred_fallthru
    _

</llo_original>
